<compile_context>
chip_gen: v7x
topology: tpu7x:2x2x1
jax: 0.10.0
libtpu: 0.0.40
codegen_flags: <defaults>
</compile_context>

<pallas_src>
import jax
import jax.numpy as jnp
from jax.experimental import pallas as pl
from jax.experimental.pallas import tpu as pltpu


def _round_up(x: int, m: int) -> int:
    return (x + m - 1) // m * m


def _lns_kernel(x_ref, h_ref, w_in_ref, w_h_ref, b_ref, inv_tau_ref, o_ref):
    # Two small MXU pushes fuse W_in(x) + W_h(h) without any wrapper-side
    # concatenation of activations.
    pre = jnp.dot(x_ref[...], w_in_ref[...], preferred_element_type=jnp.float32)
    pre = pre + jnp.dot(h_ref[...], w_h_ref[...],
                        preferred_element_type=jnp.float32)
    dx = jnp.tanh(pre + b_ref[...])                 # EUP tanh, VPU add
    h = h_ref[...]
    # inv_tau precomputed on the host -> one VPU multiply, no in-kernel divide.
    o_ref[...] = (h + (dx - h) * inv_tau_ref[...]).astype(o_ref.dtype)


def prepare_lns_params(w_in, b_in, w_h, b_h, tau):
    """One-time host-side parameter prep.

    w_in : (input_dim, hidden)   (transposed vs. torch.nn.Linear.weight)
    w_h  : (hidden, hidden)
    b_in, b_h, tau : (hidden,)
    Returns (w_in, w_h, b, inv_tau) with the two biases pre-summed and
    1/tau precomputed (so the kernel does a multiply, not a divide).
    """
    w_in = w_in.astype(jnp.float32)
    w_h = w_h.astype(jnp.float32)
    b = (b_in + b_h).astype(jnp.float32).reshape(1, -1)
    inv_tau = (1.0 / tau.astype(jnp.float32)).reshape(1, -1)
    return w_in, w_h, b, inv_tau


def _choose_batch_tiling(batch: int):
    """Returns (tile_b, b_pad, n_tiles)."""
    if batch < 16:
        # Single full-extent tile: block rows equal the array rows, so no
        # 8-row padding is needed at all.
        return batch, batch, 1
    b8 = _round_up(batch, 8)
    # >= 2 grid steps so v7x can shard the batch axis across its 2 TensorCores,
    # ~<=1024-row tiles for large batches (amortizes per-step overhead while
    # keeping padding waste to at most a few 8-row groups, never a whole tile).
    n_tiles = max(2, pl.cdiv(b8, 1024))
    tile_b = _round_up(pl.cdiv(b8, n_tiles), 8)
    return tile_b, n_tiles * tile_b, n_tiles


def liquid_neural_state(x, h, w_in, w_h, b, inv_tau):
    """Pallas wrapper.

    x : (B, input_dim), h : (B, hidden).  Params from prepare_lns_params.
    Returns h_new : (B, hidden) float32.
    """
    assert x.ndim == 2, (
        "x must be (B, input_dim): the torch docstring's (B, T, input_dim) is "
        "inconsistent with the documented (B, hidden_dim) output")
    assert h.ndim == 2 and x.shape[0] == h.shape[0]
    batch, d_in = x.shape
    hidden = h.shape[1]
    assert w_in.shape == (d_in, hidden) and w_h.shape == (hidden, hidden)

    tile_b, b_pad, n_tiles = _choose_batch_tiling(batch)

    x_p = x.astype(jnp.float32)
    h_p = h.astype(jnp.float32)
    if b_pad != batch:  # only when B is not already a multiple of the tiling
        x_p = jnp.pad(x_p, ((0, b_pad - batch), (0, 0)))
        h_p = jnp.pad(h_p, ((0, b_pad - batch), (0, 0)))

    # VMEM budget: residents (default double-buffered) + 2-deep x/h/out pipeline.
    est_bytes = 4 * (2 * (w_in.size + w_h.size + 2 * hidden)
                     + 2 * tile_b * (d_in + 2 * hidden))
    vmem_limit = (int(min(64 << 20, est_bytes + (8 << 20)))
                  if est_bytes > (12 << 20) else None)

    out = pl.pallas_call(
        _lns_kernel,
        out_shape=jax.ShapeDtypeStruct((b_pad, hidden), jnp.float32),
        grid=(n_tiles,),
        in_specs=[
            pl.BlockSpec((tile_b, d_in), lambda i: (i, 0)),     # x     : batch tile
            pl.BlockSpec((tile_b, hidden), lambda i: (i, 0)),   # h     : batch tile
            pl.BlockSpec((d_in, hidden), lambda i: (0, 0)),     # W_in  : resident
            pl.BlockSpec((hidden, hidden), lambda i: (0, 0)),   # W_h   : resident
            pl.BlockSpec((1, hidden), lambda i: (0, 0)),        # b     : resident
            pl.BlockSpec((1, hidden), lambda i: (0, 0)),        # 1/tau : resident
        ],
        out_specs=pl.BlockSpec((tile_b, hidden), lambda i: (i, 0)),
        compiler_params=pltpu.CompilerParams(
            dimension_semantics=("parallel",),   # 2-TC batch sharding on v7x
            vmem_limit_bytes=vmem_limit),
    )(x_p, h_p, w_in, w_h, b, inv_tau)

    return out if b_pad == batch else out[:batch]


def _reference(x, h, w_in, b_in, w_h, b_h, tau):
    dx = jnp.tanh(x @ w_in + b_in + h @ w_h + b_h)
    return h + (dx - h) / tau


if __name__ == "__main__":
    B, D_IN, H = 8, 16, 32

    key = jax.random.PRNGKey(0)
    k_x, k_h, k_win, k_bin, k_wh, k_bh = jax.random.split(key, 6)

    # Inputs
    x = jax.random.normal(k_x, (B, D_IN), dtype=jnp.float32)
    h = jax.random.normal(k_h, (B, H), dtype=jnp.float32)

    # Deterministic params, mimicking torch.nn.Linear's U(-1/sqrt(fan_in), ...)
    lim_in = 1.0 / jnp.sqrt(jnp.float32(D_IN))
    lim_h = 1.0 / jnp.sqrt(jnp.float32(H))
    w_in = jax.random.uniform(k_win, (D_IN, H), jnp.float32, -lim_in, lim_in)
    b_in = jax.random.uniform(k_bin, (H,), jnp.float32, -lim_in, lim_in)
    w_h = jax.random.uniform(k_wh, (H, H), jnp.float32, -lim_h, lim_h)
    b_h = jax.random.uniform(k_bh, (H,), jnp.float32, -lim_h, lim_h)
    tau = jnp.ones((H,), dtype=jnp.float32)  # torch.nn.Parameter(torch.ones(hidden_dim))

    # One-time host-side parameter prep (bias pre-sum, 1/tau precompute).
    w_in_p, w_h_p, b_p, inv_tau_p = prepare_lns_params(w_in, b_in, w_h, b_h, tau)

    lns = jax.jit(liquid_neural_state)
    out = jax.block_until_ready(lns(x, h, w_in_p, w_h_p, b_p, inv_tau_p))

    ref = _reference(x, h, w_in, b_in, w_h, b_h, tau)
    assert out.shape == (B, H)
    assert jnp.allclose(out, ref, atol=1e-5, rtol=1e-5), "mismatch vs pure-JAX reference"

    print("KERNEL_OK")
</pallas_src>

<mosaic_0001>
module attributes {stable_mosaic.version = 11 : i64} {
  func.func @_lns_kernel(%arg0: i32, %arg1: memref<8x16xf32, #tpu.memory_space<vmem>>, %arg2: memref<8x32xf32, #tpu.memory_space<vmem>>, %arg3: memref<16x32xf32, #tpu.memory_space<vmem>>, %arg4: memref<32x32xf32, #tpu.memory_space<vmem>>, %arg5: memref<1x32xf32, #tpu.memory_space<vmem>>, %arg6: memref<1x32xf32, #tpu.memory_space<vmem>>, %arg7: memref<8x32xf32, #tpu.memory_space<vmem>>) attributes {dimension_semantics = [#tpu.dimension_semantics<parallel>], iteration_bounds = array<i64: 1>, scalar_prefetch = 0 : i64, scratch_operands = 0 : i64, tpu.core_type = #tpu.core_type<tc>, window_params = [{transform_indices = @transform_0, window_bounds = array<i64: 8, 16>}, {transform_indices = @transform_1, window_bounds = array<i64: 8, 32>}, {pipeline_mode = #tpu.pipeline_mode<synchronous>, transform_indices = @transform_2, window_bounds = array<i64: 16, 32>}, {pipeline_mode = #tpu.pipeline_mode<synchronous>, transform_indices = @transform_3, window_bounds = array<i64: 32, 32>}, {pipeline_mode = #tpu.pipeline_mode<synchronous>, transform_indices = @transform_4, window_bounds = array<i64: 1, 32>}, {pipeline_mode = #tpu.pipeline_mode<synchronous>, transform_indices = @transform_5, window_bounds = array<i64: 1, 32>}, {transform_indices = @transform_6, window_bounds = array<i64: 8, 32>}]} {
    %c0 = arith.constant 0 : index
    %c0_0 = arith.constant 0 : index
    %0 = vector.load %arg1[%c0, %c0_0] : memref<8x16xf32, #tpu.memory_space<vmem>>, vector<8x16xf32>
    %c0_1 = arith.constant 0 : index
    %c0_2 = arith.constant 0 : index
    %1 = vector.load %arg3[%c0_1, %c0_2] : memref<16x32xf32, #tpu.memory_space<vmem>>, vector<16x32xf32>
    %cst = arith.constant dense<0.000000e+00> : vector<8x32xf32>
    %2 = tpu.matmul %0, %1, %cst {dimension_numbers = #tpu.dot_dimension_numbers<[1], [0], [0], [1], [0, 0, 1, 1], [], []>} : vector<8x16xf32>, vector<16x32xf32>, vector<8x32xf32> -> vector<8x32xf32>
    %c0_3 = arith.constant 0 : index
    %c0_4 = arith.constant 0 : index
    %3 = vector.load %arg2[%c0_3, %c0_4] : memref<8x32xf32, #tpu.memory_space<vmem>>, vector<8x32xf32>
    %c0_5 = arith.constant 0 : index
    %c0_6 = arith.constant 0 : index
    %4 = vector.load %arg4[%c0_5, %c0_6] : memref<32x32xf32, #tpu.memory_space<vmem>>, vector<32x32xf32>
    %cst_7 = arith.constant dense<0.000000e+00> : vector<8x32xf32>
    %5 = tpu.matmul %3, %4, %cst_7 {dimension_numbers = #tpu.dot_dimension_numbers<[1], [0], [0], [1], [0, 0, 1, 1], [], []>} : vector<8x32xf32>, vector<32x32xf32>, vector<8x32xf32> -> vector<8x32xf32>
    %6 = arith.addf %2, %5 : vector<8x32xf32>
    %c0_8 = arith.constant 0 : index
    %c0_9 = arith.constant 0 : index
    %7 = vector.load %arg5[%c0_8, %c0_9] : memref<1x32xf32, #tpu.memory_space<vmem>>, vector<1x32xf32>
    %8 = vector.broadcast %7 : vector<1x32xf32> to vector<8x32xf32>
    %9 = arith.addf %6, %8 : vector<8x32xf32>
    %10 = math.tanh %9 : vector<8x32xf32>
    %c0_10 = arith.constant 0 : index
    %c0_11 = arith.constant 0 : index
    %11 = vector.load %arg2[%c0_10, %c0_11] : memref<8x32xf32, #tpu.memory_space<vmem>>, vector<8x32xf32>
    %12 = arith.subf %10, %11 : vector<8x32xf32>
    %c0_12 = arith.constant 0 : index
    %c0_13 = arith.constant 0 : index
    %13 = vector.load %arg6[%c0_12, %c0_13] : memref<1x32xf32, #tpu.memory_space<vmem>>, vector<1x32xf32>
    %14 = vector.broadcast %13 : vector<1x32xf32> to vector<8x32xf32>
    %15 = arith.mulf %12, %14 : vector<8x32xf32>
    %16 = arith.addf %11, %15 : vector<8x32xf32>
    %c0_14 = arith.constant 0 : index
    %c0_15 = arith.constant 0 : index
    %17 = vector.load %arg7[%c0_14, %c0_15] : memref<8x32xf32, #tpu.memory_space<vmem>>, vector<8x32xf32>
    tpu.vector_store %arg7[%c0_14, %c0_15], %16 {strides = array<i32>} : memref<8x32xf32, #tpu.memory_space<vmem>>, vector<8x32xf32>,
    return
  }
  func.func @transform_0(%arg0: i32) -> (i32, i32) {
    %c0_i32 = arith.constant 0 : i32
    %c0_i32_0 = arith.constant 0 : i32
    return %arg0, %c0_i32 : i32, i32
  }
  func.func @transform_1(%arg0: i32) -> (i32, i32) {
    %c0_i32 = arith.constant 0 : i32
    %c0_i32_0 = arith.constant 0 : i32
    return %arg0, %c0_i32 : i32, i32
  }
  func.func @transform_2(%arg0: i32) -> (i32, i32) {
    %c0_i32 = arith.constant 0 : i32
    %c0_i32_0 = arith.constant 0 : i32
    %c0_i32_1 = arith.constant 0 : i32
    return %c0_i32, %c0_i32_0 : i32, i32
  }
  func.func @transform_3(%arg0: i32) -> (i32, i32) {
    %c0_i32 = arith.constant 0 : i32
    %c0_i32_0 = arith.constant 0 : i32
    %c0_i32_1 = arith.constant 0 : i32
    return %c0_i32, %c0_i32_0 : i32, i32
  }
  func.func @transform_4(%arg0: i32) -> (i32, i32) {
    %c0_i32 = arith.constant 0 : i32
    %c0_i32_0 = arith.constant 0 : i32
    %c0_i32_1 = arith.constant 0 : i32
    return %c0_i32, %c0_i32_0 : i32, i32
  }
  func.func @transform_5(%arg0: i32) -> (i32, i32) {
    %c0_i32 = arith.constant 0 : i32
    %c0_i32_0 = arith.constant 0 : i32
    %c0_i32_1 = arith.constant 0 : i32
    return %c0_i32, %c0_i32_0 : i32, i32
  }
  func.func @transform_6(%arg0: i32) -> (i32, i32) {
    %c0_i32 = arith.constant 0 : i32
    %c0_i32_0 = arith.constant 0 : i32
    return %arg0, %c0_i32 : i32, i32
  }
}

</mosaic_0001>

<llo_original>
// kernel: liquid_neural_state.1
$region0: #{liquid_neural_state.1}
  #allocation0 [shape = 'u32[]', space=smem, size = 0x4, offset = 0x4, fixed_abs, tag = 'smem constant byte address 0x4 - core index']
  #allocation1 [shape = 'u32[144,128]{1,0:T(1,128)}', space=vmem, size = 0x12000, scoped, tag = 'internal scratch']
  %s0 = inlined_call_operand.hbm [shape: f32[8,16], index: 0, kind: input, shape index: {}]
  %s1 = inlined_call_operand.hbm [shape: f32[8,32], index: 1, kind: input, shape index: {}]
  %s2 = inlined_call_operand.hbm [shape: f32[16,32], index: 2, kind: input, shape index: {}]
  %s3 = inlined_call_operand.hbm [shape: f32[32,32], index: 3, kind: input, shape index: {}]
  %s4 = inlined_call_operand.vmem [shape: f32[1,32], index: 4, kind: input, shape index: {}]
  %s5 = inlined_call_operand.vmem [shape: f32[1,32], index: 5, kind: input, shape index: {}]
  %s6 = inlined_call_operand.hbm [shape: f32[8,32], index: 6, kind: output, shape index: {}]
  %s7 = sld [smem:[#allocation0]]
  $region50: #{liquid_neural_state.1} parent=0
    _
  %s9 = ssub.s32 1, %s7
  %s10 = scalar_select 0, %s9, %s7
  $region1: #{liquid_neural_state.1} parent=0
    #allocation2 [shape = 'u8[4096]{0}', space=vmem, size = 0x1000, scoped, tag = 'input window, operand 0, single buffered']
    #allocation3 [shape = 's32[1]{0}', space=sflag, size = 0x4, scoped, tag = 'scoped memory for liquid_neural_state.1']
    #allocation4 [shape = 's32[1]{0}', space=sflag, size = 0x4, scoped, tag = 'scoped memory for liquid_neural_state.1']
    #allocation5 [shape = 'u8[4096]{0}', space=vmem, size = 0x1000, scoped, tag = 'input window, operand 1, single buffered']
    #allocation6 [shape = 's32[1]{0}', space=sflag, size = 0x4, scoped, tag = 'scoped memory for liquid_neural_state.1']
    #allocation7 [shape = 'u8[8192]{0}', space=vmem, size = 0x2000, scoped, tag = 'input window, operand 2, single buffered']
    #allocation8 [shape = 'u8[16384]{0}', space=vmem, size = 0x4000, scoped, tag = 'input window, operand 3, single buffered']
    #allocation9 [shape = 's32[1]{0}', space=sflag, size = 0x4, scoped, tag = 'scoped memory for liquid_neural_state.1']
    #allocation10 [shape = 'u8[4096]{0}', space=vmem, size = 0x1000, scoped, tag = 'output window, operand 0, single buffered']
    %11 = vsyncpa [#allocation3], 0
    %12 = vsyncpa [#allocation6], 0
    %13 = vsyncpa [#allocation9], 0
    %14 = vsyncpa [#allocation4], 0
    // Predicated region
    $region2: #{liquid_neural_state.1} parent=1 // pred_check
      _
    $region3: #{liquid_neural_state.1} parent=1 // pred_check_branch
      %16 = sbr.rel (0) target = $region5
    $region4: #{liquid_neural_state.1} parent=1 // pred_region
      %s18 = ssub.s32 128, 128
      %19 = vsyncadd [#allocation3], %s18
      %s21 = sshll.u32 [#allocation2], 4
      %s22 = int_to_ptr.vmem [resolvable:$true] %s21
      %24 = dma.hbm_to_vmem [thread:$0]  %s0, 128, %s22, [#allocation3]
    $region5: #{liquid_neural_state.1} parent=1 // pred_fallthru
      _
    // Predicated region
    $region6: #{liquid_neural_state.1} parent=1 // pred_check
      _
    $region7: #{liquid_neural_state.1} parent=1 // pred_check_branch
      %26 = sbr.rel (0) target = $region9
    $region8: #{liquid_neural_state.1} parent=1 // pred_region
      %s28 = ssub.s32 128, 128
      %29 = vsyncadd [#allocation6], %s28
      %s31 = sshll.u32 [#allocation5], 4
      %s32 = int_to_ptr.vmem [resolvable:$true] %s31
      %34 = dma.hbm_to_vmem [thread:$0]  %s1, 128, %s32, [#allocation6]
    $region9: #{liquid_neural_state.1} parent=1 // pred_fallthru
      _
    // Predicated region
    $region10: #{liquid_neural_state.1} parent=1 // pred_check
      _
    $region11: #{liquid_neural_state.1} parent=1 // pred_check_branch
      %36 = sbr.rel (0) target = $region13
    $region12: #{liquid_neural_state.1} parent=1 // pred_region
      %s38 = ssub.s32 256, 256
      %39 = vsyncadd [#allocation6], %s38
      %s40 = sshll.u32 [#allocation7], 4
      %s41 = int_to_ptr.vmem [resolvable:$true] %s40
      %46 = dma.hbm_to_vmem [thread:$0]  %s2, 256, %s41, [#allocation6], 128, 128, 8
    $region13: #{liquid_neural_state.1} parent=1 // pred_fallthru
      _
    // Predicated region
    $region14: #{liquid_neural_state.1} parent=1 // pred_check
      _
    $region15: #{liquid_neural_state.1} parent=1 // pred_check_branch
      %48 = sbr.rel (0) target = $region17
    $region16: #{liquid_neural_state.1} parent=1 // pred_region
      %s50 = ssub.s32 512, 512
      %51 = vsyncadd [#allocation9], %s50
      %s52 = sshll.u32 [#allocation8], 4
      %s53 = int_to_ptr.vmem [resolvable:$true] %s52
      %58 = dma.hbm_to_vmem [thread:$0]  %s3, 512, %s53, [#allocation9], 128, 128, 8
    $region17: #{liquid_neural_state.1} parent=1 // pred_fallthru
      _
    // Predicated region
    $region18: #{liquid_neural_state.1} parent=1 // pred_check
      _
    $region19: #{liquid_neural_state.1} parent=1 // pred_check_branch
      %60 = sbr.rel (0) target = $region21
    $region20: #{liquid_neural_state.1} parent=1 // pred_region
      _
    $region21: #{liquid_neural_state.1} parent=1 // pred_fallthru
      _
    // Predicated region
    $region22: #{liquid_neural_state.1} parent=1 // pred_check
      _
    $region23: #{liquid_neural_state.1} parent=1 // pred_check_branch
      %62 = sbr.rel (0) target = $region25
    $region24: #{liquid_neural_state.1} parent=1 // pred_region
      _
    $region25: #{liquid_neural_state.1} parent=1 // pred_fallthru
      _
    // Predicated region
    $region26: #{liquid_neural_state.1} parent=1 // pred_check
      _
    $region27: #{liquid_neural_state.1} parent=1 // pred_check_branch
      %64 = sbr.rel (0) target = $region29
    $region28: #{liquid_neural_state.1} parent=1 // pred_region
      %65 = dma.done [#allocation3], 128
    $region29: #{liquid_neural_state.1} parent=1 // pred_fallthru
      _
    // Predicated region
    $region30: #{liquid_neural_state.1} parent=1 // pred_check
      _
    $region31: #{liquid_neural_state.1} parent=1 // pred_check_branch
      %67 = sbr.rel (0) target = $region33
    $region32: #{liquid_neural_state.1} parent=1 // pred_region
      %68 = dma.done [#allocation6], 128
    $region33: #{liquid_neural_state.1} parent=1 // pred_fallthru
      _
    // Predicated region
    $region34: #{liquid_neural_state.1} parent=1 // pred_check
      _
    $region35: #{liquid_neural_state.1} parent=1 // pred_check_branch
      %70 = sbr.rel (0) target = $region37
    $region36: #{liquid_neural_state.1} parent=1 // pred_region
      %71 = dma.done [#allocation6], 256
    $region37: #{liquid_neural_state.1} parent=1 // pred_fallthru
      _
    // Predicated region
    $region38: #{liquid_neural_state.1} parent=1 // pred_check
      _
    $region39: #{liquid_neural_state.1} parent=1 // pred_check_branch
      %73 = sbr.rel (0) target = $region41
    $region40: #{liquid_neural_state.1} parent=1 // pred_region
      %74 = dma.done [#allocation9], 512
    $region41: #{liquid_neural_state.1} parent=1 // pred_fallthru
      _
    %v75 = vld [vmem:[#allocation2] sm:$0xff]
    %v76 = vld [vmem:[#allocation7] sm:$0xff]
    %v77 = vld [vmem:[#allocation7 + $0x8] sm:$0xff]
    %v78 = vld [vmem:[#allocation5] sm:$0xff]
    %v79 = vld [vmem:[#allocation8] sm:$0xff]
    %v80 = vld [vmem:[#allocation8 + $0x8] sm:$0xff]
    %v81 = vld [vmem:[#allocation8 + $0x10] sm:$0xff]
    %v82 = vld [vmem:[#allocation8 + $0x18] sm:$0xff]
    %vm83 = vcmask 261120
    %v85 = vsel %vm83, %v78, 0
    %87 = vmatprep.subr.mxu0 0.0
    %88 = vmatpush1.msra.mxu0 %v79
    %89 = vmatprep.subr.mxu0 0.0
    %90 = vmatpush1.msra.mxu0 %v80
    %91 = vmatprep.subr.mxu0 0.0
    %92 = vmatpush1.msra.mxu0 %v81
    %93 = vmatprep.subr.mxu0 0.0
    %94 = vmatpush1.msra.mxu0 %v82
    %95 = vmatprep.subr.mxu0 0.0
    %96 = vmatpush1.msra.mxu0 0.0
    %97 = vmatprep.subr.mxu0 0.0
    %98 = vmatpush1.msra.mxu0 0.0
    %99 = vmatprep.subr.mxu0 0.0
    %100 = vmatpush1.msra.mxu0 0.0
    %101 = vmatprep.subr.mxu0 0.0
    %102 = vmatpush1.msra.mxu0 0.0
    %103 = vmatprep.subr.mxu0 0.0
    %104 = vmatpush1.msra.mxu0 0.0
    %105 = vmatprep.subr.mxu0 0.0
    %106 = vmatpush1.msra.mxu0 0.0
    %107 = vmatprep.subr.mxu0 0.0
    %108 = vmatpush1.msra.mxu0 0.0
    %109 = vmatprep.subr.mxu0 0.0
    %110 = vmatpush1.msra.mxu0 0.0
    %111 = vmatprep.subr.mxu0 0.0
    %112 = vmatpush1.msra.mxu0 0.0
    %113 = vmatprep.subr.mxu0 0.0
    %114 = vmatpush1.msra.mxu0 0.0
    %115 = vmatprep.subr.mxu0 0.0
    %116 = vmatpush1.msra.mxu0 0.0
    %117 = vmatprep.subr.mxu0 0.0
    %118 = vmatpush1.msra.mxu0 0.0
    %119 = vmatprep.subr.mxu0 0.0
    %120 = vmatpush1.msra.mxu0 0.0
    %121 = vmatprep.subr.mxu0 0.0
    %122 = vmatpush1.msra.mxu0 0.0
    %123 = vmatprep.subr.mxu0 0.0
    %124 = vmatpush1.msra.mxu0 0.0
    %125 = vmatprep.subr.mxu0 0.0
    %126 = vmatpush1.msra.mxu0 0.0
    %127 = vmatprep.subr.mxu0 0.0
    %128 = vmatpush1.msra.mxu0 0.0
    %129 = vmatprep.subr.mxu0 0.0
    %130 = vmatpush1.msra.mxu0 0.0
    %131 = vmatprep.subr.mxu0 0.0
    %132 = vmatpush1.msra.mxu0 0.0
    %133 = vmatprep.subr.mxu0 0.0
    %134 = vmatpush1.msra.mxu0 0.0
    %135 = vmatprep.subr.mxu0 0.0
    %136 = vmatpush1.msra.mxu0 0.0
    %137 = vmatprep.subr.mxu0 0.0
    %138 = vmatpush1.msra.mxu0 0.0
    %139 = vmatprep.subr.mxu0 0.0
    %140 = vmatpush1.msra.mxu0 0.0
    %141 = vmatprep.subr.mxu0 0.0
    %142 = vmatpush1.msra.mxu0 0.0
    %143 = vmatprep.subr.mxu0 0.0
    %144 = vmatpush1.msra.mxu0 0.0
    %145 = vmatprep.subr.mxu0 0.0
    %146 = vmatpush1.msra.mxu0 0.0
    %147 = vmatprep.subr.mxu0 0.0
    %148 = vmatpush1.msra.mxu0 0.0
    %149 = vmatprep.subr.mxu0 0.0
    %150 = vmatpush1.msra.mxu0 0.0
    %151 = vmatprep.mubr.f32.mxu0 0.0
    %152 = vmatmul.mubr.f32.gmra.mrb[0].mxu0 %v85
    %v153 = vpop.f32.mrb[0].mxu0
    %v154 = vadd.f32 0.0, %v153
    %v155 = vpop.f32.mrb[0].mxu0
    %156 = vdwg.mxu0
    %vm157 = vcmask 130048
    %v159 = vsel %vm157, %v75, 0
    %161 = vmatprep.subr.mxu0 0.0
    %162 = vmatpush1.msra.mxu0 %v76
    %163 = vmatprep.subr.mxu0 0.0
    %164 = vmatpush1.msra.mxu0 %v77
    %165 = vmatprep.subr.mxu0 0.0
    %166 = vmatpush1.msra.mxu0 0.0
    %167 = vmatprep.subr.mxu0 0.0
    %168 = vmatpush1.msra.mxu0 0.0
    %169 = vmatprep.subr.mxu0 0.0
    %170 = vmatpush1.msra.mxu0 0.0
    %171 = vmatprep.subr.mxu0 0.0
    %172 = vmatpush1.msra.mxu0 0.0
    %173 = vmatprep.subr.mxu0 0.0
    %174 = vmatpush1.msra.mxu0 0.0
    %175 = vmatprep.subr.mxu0 0.0
    %176 = vmatpush1.msra.mxu0 0.0
    %177 = vmatprep.subr.mxu0 0.0
    %178 = vmatpush1.msra.mxu0 0.0
    %179 = vmatprep.subr.mxu0 0.0
    %180 = vmatpush1.msra.mxu0 0.0
    %181 = vmatprep.subr.mxu0 0.0
    %182 = vmatpush1.msra.mxu0 0.0
    %183 = vmatprep.subr.mxu0 0.0
    %184 = vmatpush1.msra.mxu0 0.0
    %185 = vmatprep.subr.mxu0 0.0
    %186 = vmatpush1.msra.mxu0 0.0
    %187 = vmatprep.subr.mxu0 0.0
    %188 = vmatpush1.msra.mxu0 0.0
    %189 = vmatprep.subr.mxu0 0.0
    %190 = vmatpush1.msra.mxu0 0.0
    %191 = vmatprep.subr.mxu0 0.0
    %192 = vmatpush1.msra.mxu0 0.0
    %193 = vmatprep.subr.mxu0 0.0
    %194 = vmatpush1.msra.mxu0 0.0
    %195 = vmatprep.subr.mxu0 0.0
    %196 = vmatpush1.msra.mxu0 0.0
    %197 = vmatprep.subr.mxu0 0.0
    %198 = vmatpush1.msra.mxu0 0.0
    %199 = vmatprep.subr.mxu0 0.0
    %200 = vmatpush1.msra.mxu0 0.0
    %201 = vmatprep.subr.mxu0 0.0
    %202 = vmatpush1.msra.mxu0 0.0
    %203 = vmatprep.subr.mxu0 0.0
    %204 = vmatpush1.msra.mxu0 0.0
    %205 = vmatprep.subr.mxu0 0.0
    %206 = vmatpush1.msra.mxu0 0.0
    %207 = vmatprep.subr.mxu0 0.0
    %208 = vmatpush1.msra.mxu0 0.0
    %209 = vmatprep.subr.mxu0 0.0
    %210 = vmatpush1.msra.mxu0 0.0
    %211 = vmatprep.subr.mxu0 0.0
    %212 = vmatpush1.msra.mxu0 0.0
    %213 = vmatprep.subr.mxu0 0.0
    %214 = vmatpush1.msra.mxu0 0.0
    %215 = vmatprep.subr.mxu0 0.0
    %216 = vmatpush1.msra.mxu0 0.0
    %217 = vmatprep.subr.mxu0 0.0
    %218 = vmatpush1.msra.mxu0 0.0
    %219 = vmatprep.subr.mxu0 0.0
    %220 = vmatpush1.msra.mxu0 0.0
    %221 = vmatprep.subr.mxu0 0.0
    %222 = vmatpush1.msra.mxu0 0.0
    %223 = vmatprep.subr.mxu0 0.0
    %224 = vmatpush1.msra.mxu0 0.0
    %225 = vmatprep.mubr.f32.mxu0 0.0
    %226 = vmatmul.mubr.f32.gmra.mrb[0].mxu0 %v159
    %v227 = vpop.f32.mrb[0].mxu0
    %v228 = vadd.f32 %v154, %v227
    %v229 = vpop.f32.mrb[0].mxu0
    %230 = vdwg.mxu0
    %v231 = vld [vmem:[%s4] sm:$0x1]
    %v233 = vlaneseq
    %v234 = vshrl.u32 %v233, 7
    %v235 = vsub.s32 0, %v234
    %v236 = vrot.slane %v231, %v235
    %v238 = vadd.f32 %v228, %v236
    %v239 = vtanh.pop %v238
    %v240 = vsub.f32 %v239, %v78
    %v241 = vld [vmem:[%s5] sm:$0x1]
    %v243 = vlaneseq
    %v244 = vshrl.u32 %v243, 7
    %v245 = vsub.s32 0, %v244
    %v246 = vrot.slane %v241, %v245
    %v248 = vmul.f32 %v240, %v246
    %v249 = vadd.f32 %v78, %v248
    %250 = vst.msk [vmem:[#allocation10] sm:$0xff] %vm83, %v249
    // Predicated region
    $region42: #{liquid_neural_state.1} parent=1 // pred_check
      _
    $region43: #{liquid_neural_state.1} parent=1 // pred_check_branch
      %252 = sbr.rel (0) target = $region45
    $region44: #{liquid_neural_state.1} parent=1 // pred_region
      %s254 = ssub.s32 128, 128
      %255 = vsyncadd [#allocation4], %s254
      %s257 = sshll.u32 [#allocation10], 4
      %s258 = int_to_ptr.vmem [resolvable:$true] %s257
      %260 = dma.vmem_to_hbm [thread:$0]  %s258, 128, %s6, [#allocation4]
    $region45: #{liquid_neural_state.1} parent=1 // pred_fallthru
      _
    // Predicated region
    $region46: #{liquid_neural_state.1} parent=1 // pred_check
      _
    $region47: #{liquid_neural_state.1} parent=1 // pred_check_branch
      %262 = sbr.rel (0) target = $region49
    $region48: #{liquid_neural_state.1} parent=1 // pred_region
      %263 = dma.done [#allocation4], 128
    $region49: #{liquid_neural_state.1} parent=1 // pred_fallthru
      _
    %264 = vsyncpa [#allocation3], 1
    %265 = vsyncpa [#allocation6], 1
    %266 = vsyncpa [#allocation9], 1
    %267 = vsyncpa [#allocation4], 1

</llo_original>
